<compile_context>
chip_gen: v7x
topology: tpu7x:2x2x1
jax: 0.10.0
libtpu: 0.0.40
codegen_flags: <defaults>
</compile_context>

<pallas_src>
import functools

import jax
import jax.numpy as jnp
from jax import lax
from jax.experimental import pallas as pl
from jax.experimental.pallas import tpu as pltpu


def _gather_kernel(idx_ref, x_ref, o_ref, *, compute_dtype, precision):
    # idx_ref : VMEM (Bt, Kp, 1) int32 — kept-patch indices (padded with 0).
    # x_ref   : VMEM (Bt, N, tile_d)   — all patches, one lane tile of features.
    # o_ref   : VMEM (Bt, Kp, tile_d)  — gathered output tile.
    bt, kp, _ = idx_ref.shape
    n = x_ref.shape[1]

    # One-hot selection: sel[b, k, r] = 1 iff r == keep_idx[b, k].
    col = lax.broadcasted_iota(jnp.int32, (bt, kp, n), 2)
    sel = (col == idx_ref[...]).astype(compute_dtype)

    xv = x_ref[...].astype(compute_dtype)
    out = jnp.einsum(
        "bkn,bnd->bkd",
        sel,
        xv,
        preferred_element_type=jnp.float32,
        precision=precision,
    )
    o_ref[...] = out.astype(o_ref.dtype)


def _round_up(v, m):
    return ((v + m - 1) // m) * m


def _chip_vmem_budget():
    """(per-step VMEM budget bytes, dual_core_guess)."""
    try:
        vmem_phys = pltpu.get_tpu_info().vmem_capacity_bytes
    except Exception:  # pragma: no cover - conservative fallback
        vmem_phys = 128 * 1024 * 1024
    if vmem_phys <= 64 * 1024 * 1024:
        # v7x-class: 64 MiB VMEM per TensorCore, 2 TCs per chip.
        return 20 * 1024 * 1024, True
    # v5e / v6e: 128 MiB physical VMEM, single TC.
    return 28 * 1024 * 1024, False


def _block_bytes(bt, n, k_pad, tile_d, itemsize):
    x_b = 2 * bt * n * tile_d * itemsize        # double-buffered x block
    o_b = 2 * bt * k_pad * tile_d * itemsize    # double-buffered out block
    sel_b = bt * k_pad * n * 4                  # one-hot sel (f32 worst case)
    acc_b = bt * k_pad * tile_d * 4             # f32 matmul result temp
    up_b = bt * n * tile_d * 4                  # possible f32 upcast of x tile
    idx_b = 2 * bt * k_pad * 4                  # index block
    return x_b + o_b + sel_b + acc_b + up_b + idx_b


def _divisors_desc(v, upper):
    return [t for t in range(min(upper, v), 0, -1) if v % t == 0]


def _pick_blocks(b, n, k_pad, d128, itemsize, budget):
    # Batch block: largest divisor of b (<= 8) whose minimal-tile block fits.
    bt = 1
    for cand in _divisors_desc(b, 8):
        if _block_bytes(cand, n, k_pad, 128, itemsize) <= budget:
            bt = cand
            break
    # Feature tile: whole (128-aligned) D if it fits; otherwise largest
    # 128-multiple under budget, preferring a divisor of d128 (within 2x)
    # to avoid extra D padding.
    if _block_bytes(bt, n, k_pad, d128, itemsize) <= budget:
        return bt, d128
    t = 128
    while t + 128 <= d128 and _block_bytes(bt, n, k_pad, t + 128, itemsize) <= budget:
        t += 128
    tile_d = t
    for cand in range(t, 127, -128):
        if d128 % cand == 0:
            if cand * 2 >= t:
                tile_d = cand
            break
    return bt, tile_d


def patch_dropout(x, key, prob, training=True):
    """JAX/Pallas equivalent of PatchDropout.forward."""
    assert 0 <= prob < 1.0
    if not training or prob == 0.0:
        return x

    b, n, d = x.shape
    num_keep = max(1, int(n * (1 - prob)))

    # torch.randn(b, n).topk(num_keep).indices equivalent (cheap host-side glue).
    scores = jax.random.normal(key, (b, n), dtype=jnp.float32)
    _, keep_idx = lax.top_k(scores, num_keep)
    keep_idx = keep_idx.astype(jnp.int32)

    itemsize = x.dtype.itemsize
    sublane = max(8, 32 // itemsize)           # 8 for f32, 16 for bf16, 32 for 8-bit
    k_pad = _round_up(num_keep, sublane)
    d128 = _round_up(d, 128)

    budget, dual_core = _chip_vmem_budget()
    bt, tile_d = _pick_blocks(b, n, k_pad, d128, itemsize, budget)
    d_pad = _round_up(d128, tile_d)
    n_d = d_pad // tile_d

    # v7x has 2 TensorCores; with a single parallel block the second core idles.
    if dual_core and (b // bt) * n_d < 2 and b >= 2:
        for cand in _divisors_desc(b, b // 2):
            bt = cand
            break

    # Pad kept indices to the sublane-rounded count (extra rows gather row 0 and are
    # sliced off) and features up to the lane/tile-rounded width.
    idx3 = jnp.pad(keep_idx, ((0, 0), (0, k_pad - num_keep)))[:, :, None]
    x_in = x if d_pad == d else jnp.pad(x, ((0, 0), (0, 0), (0, d_pad - d)))

    # Dtype gating (see header): bf16 native; everything else through f32 + HIGHEST
    # precision so the 0/1-weighted gather is exact and never hits an unsupported
    # MXU dtype (fp8 on v5e/v6e, int on v7x).
    if x.dtype == jnp.bfloat16:
        compute_dtype, precision = jnp.bfloat16, lax.Precision.DEFAULT
    else:
        compute_dtype, precision = jnp.float32, lax.Precision.HIGHEST

    kernel = functools.partial(
        _gather_kernel, compute_dtype=compute_dtype, precision=precision
    )

    out = pl.pallas_call(
        kernel,
        out_shape=jax.ShapeDtypeStruct((b, k_pad, d_pad), x.dtype),
        grid_spec=pltpu.PrefetchScalarGridSpec(
            num_scalar_prefetch=0,
            grid=(b // bt, n_d),
            in_specs=[
                # Kept indices for this batch block; same block across d tiles.
                pl.BlockSpec((bt, k_pad, 1), lambda i, j: (i, 0, 0)),
                # All N patches of Bt batch rows, one 128-aligned feature tile.
                pl.BlockSpec((bt, n, tile_d), lambda i, j: (i, 0, j)),
            ],
            out_specs=pl.BlockSpec((bt, k_pad, tile_d), lambda i, j: (i, 0, j)),
        ),
        compiler_params=pltpu.CompilerParams(
            dimension_semantics=("parallel", "parallel"),
            vmem_limit_bytes=budget + (8 << 20),
        ),
    )(idx3, x_in)

    return out[:, :num_keep, :d]


if __name__ == "__main__":
    key = jax.random.PRNGKey(0)
    xkey, dkey, x2key, x3key = jax.random.split(key, 4)

    B, N, prob = 2, 8, 0.25
    num_keep = max(1, int(N * (1 - prob)))

    # Shared reference index selection (same key/shape as inside the wrapper).
    scores = jax.random.normal(dkey, (B, N), dtype=jnp.float32)
    _, keep_idx = lax.top_k(scores, num_keep)

    # Case 1: lane-dense feature dim (D = 128), f32.
    D = 128
    x = jax.random.normal(xkey, (B, N, D), dtype=jnp.float32)
    out = jax.block_until_ready(patch_dropout(x, dkey, prob, training=True))
    ref = x[jnp.arange(B)[:, None], keep_idx]
    assert out.shape == (B, num_keep, D), out.shape
    assert jnp.allclose(out, ref), "mismatch vs reference gather (D=128, f32)"

    # Case 2: ragged feature dim (D = 32), exercises lane + sublane padding paths.
    D2 = 32
    x2 = jax.random.normal(x2key, (B, N, D2), dtype=jnp.float32)
    out2 = jax.block_until_ready(patch_dropout(x2, dkey, prob, training=True))
    ref2 = x2[jnp.arange(B)[:, None], keep_idx]
    assert out2.shape == (B, num_keep, D2), out2.shape
    assert jnp.allclose(out2, ref2), "mismatch vs reference gather (D=32, f32)"

    # Case 3: bf16 inputs (native MXU compute path).
    x3 = jax.random.normal(x3key, (B, N, D), dtype=jnp.float32).astype(jnp.bfloat16)
    out3 = jax.block_until_ready(patch_dropout(x3, dkey, prob, training=True))
    ref3 = x3[jnp.arange(B)[:, None], keep_idx]
    assert out3.shape == (B, num_keep, D), out3.shape
    assert jnp.allclose(out3.astype(jnp.float32), ref3.astype(jnp.float32)), (
        "mismatch vs reference gather (bf16)")

    # Eval-mode / prob == 0 passthrough.
    assert patch_dropout(x, dkey, prob, training=False) is x
    assert patch_dropout(x, dkey, 0.0, training=True) is x

    print("KERNEL_OK")
</pallas_src>

<mosaic_0001>
module attributes {stable_mosaic.version = 11 : i64} {
  func.func @_gather_kernel(%arg0: i32, %arg1: i32, %arg2: memref<2x8x1xi32, #tpu.memory_space<vmem>>, %arg3: memref<2x8x128xf32, #tpu.memory_space<vmem>>, %arg4: memref<2x8x128xf32, #tpu.memory_space<vmem>>) attributes {dimension_semantics = [#tpu.dimension_semantics<parallel>, #tpu.dimension_semantics<parallel>], iteration_bounds = array<i64: 1, 1>, scalar_prefetch = 0 : i64, scratch_operands = 0 : i64, tpu.core_type = #tpu.core_type<tc>, window_params = [{transform_indices = @transform_0, window_bounds = array<i64: 2, 8, 1>}, {transform_indices = @transform_1, window_bounds = array<i64: 2, 8, 128>}, {transform_indices = @transform_2, window_bounds = array<i64: 2, 8, 128>}]} {
    %0 = tpu.iota {dimensions = array<i32: 2>} : vector<2x8x8xi32>
    %c0 = arith.constant 0 : index
    %c0_0 = arith.constant 0 : index
    %c0_1 = arith.constant 0 : index
    %1 = vector.load %arg2[%c0, %c0_0, %c0_1] : memref<2x8x1xi32, #tpu.memory_space<vmem>>, vector<2x8x1xi32>
    %2 = vector.broadcast %1 : vector<2x8x1xi32> to vector<2x8x8xi32>
    %3 = arith.cmpi eq, %0, %2 : vector<2x8x8xi32>
    %4 = arith.extui %3 : vector<2x8x8xi1> to vector<2x8x8xi32>
    %5 = arith.sitofp %4 : vector<2x8x8xi32> to vector<2x8x8xf32>
    %c0_2 = arith.constant 0 : index
    %c0_3 = arith.constant 0 : index
    %c0_4 = arith.constant 0 : index
    %6 = vector.load %arg3[%c0_2, %c0_3, %c0_4] : memref<2x8x128xf32, #tpu.memory_space<vmem>>, vector<2x8x128xf32>
    "tpu.trace_start"() <{level = 10 : i32, message = "bkn,bnd->bkd"}> : () -> ()
    %cst = arith.constant dense<0.000000e+00> : vector<2x8x128xf32>
    %7 = tpu.matmul %5, %6, %cst {dimension_numbers = #tpu.dot_dimension_numbers<[2], [1], [1], [2], [0, 0, 0, 1, 1, 2], [0], [0]>, precision = #tpu.contract_precision<fp32>} : vector<2x8x8xf32>, vector<2x8x128xf32>, vector<2x8x128xf32> -> vector<2x8x128xf32>
    "tpu.trace_stop"() : () -> ()
    %c0_5 = arith.constant 0 : index
    %c0_6 = arith.constant 0 : index
    %c0_7 = arith.constant 0 : index
    %8 = vector.load %arg4[%c0_5, %c0_6, %c0_7] : memref<2x8x128xf32, #tpu.memory_space<vmem>>, vector<2x8x128xf32>
    tpu.vector_store %arg4[%c0_5, %c0_6, %c0_7], %7 {strides = array<i32>} : memref<2x8x128xf32, #tpu.memory_space<vmem>>, vector<2x8x128xf32>,
    return
  }
  func.func @transform_0(%arg0: i32, %arg1: i32) -> (i32, i32, i32) {
    %c0_i32 = arith.constant 0 : i32
    %c0_i32_0 = arith.constant 0 : i32
    %c0_i32_1 = arith.constant 0 : i32
    return %arg0, %c0_i32, %c0_i32_0 : i32, i32, i32
  }
  func.func @transform_1(%arg0: i32, %arg1: i32) -> (i32, i32, i32) {
    %c0_i32 = arith.constant 0 : i32
    %c0_i32_0 = arith.constant 0 : i32
    return %arg0, %c0_i32, %arg1 : i32, i32, i32
  }
  func.func @transform_2(%arg0: i32, %arg1: i32) -> (i32, i32, i32) {
    %c0_i32 = arith.constant 0 : i32
    %c0_i32_0 = arith.constant 0 : i32
    return %arg0, %c0_i32, %arg1 : i32, i32, i32
  }
}

</mosaic_0001>

<llo_original>
// kernel: tpu_custom_call.1
$region0: #{tpu_custom_call.1}
  #allocation0 [shape = 'u32[]', space=smem, size = 0x4, offset = 0x4, fixed_abs, tag = 'smem constant byte address 0x4 - core index']
  #allocation1 [shape = 'u32[144,128]{1,0:T(1,128)}', space=vmem, size = 0x12000, scoped, tag = 'internal scratch']
  %s0 = inlined_call_operand.vmem [shape: s32[2,8,1], index: 0, kind: input, shape index: {}]
  %s1 = inlined_call_operand.vmem [shape: f32[2,8,128], index: 1, kind: input, shape index: {}]
  %s2 = inlined_call_operand.hbm [shape: f32[2,8,128], index: 2, kind: output, shape index: {}]
  %s3 = sld [smem:[#allocation0]]
  $region18: #{tpu_custom_call.1} parent=0
    _
  %s5 = ssub.s32 1, %s3
  %s6 = scalar_select 0, %s5, %s3
  $region1: #{tpu_custom_call.1} parent=0
    #allocation2 [shape = 'u8[8192]{0}', space=vmem, size = 0x2000, scoped, tag = 'output window, operand 0, single buffered']
    #allocation3 [shape = 's32[1]{0}', space=sflag, size = 0x4, scoped, tag = 'scoped memory for tpu_custom_call.1']
    %7 = vsyncpa [#allocation3], 0
    // Predicated region
    $region2: #{tpu_custom_call.1} parent=1 // pred_check
      _
    $region3: #{tpu_custom_call.1} parent=1 // pred_check_branch
      %9 = sbr.rel (0) target = $region5
    $region4: #{tpu_custom_call.1} parent=1 // pred_region
      _
    $region5: #{tpu_custom_call.1} parent=1 // pred_fallthru
      _
    // Predicated region
    $region6: #{tpu_custom_call.1} parent=1 // pred_check
      _
    $region7: #{tpu_custom_call.1} parent=1 // pred_check_branch
      %11 = sbr.rel (0) target = $region9
    $region8: #{tpu_custom_call.1} parent=1 // pred_region
      _
    $region9: #{tpu_custom_call.1} parent=1 // pred_fallthru
      _
    %v12 = vlaneseq
    %v13 = vand.u32 %v12, 127
    %v14 = vld [vmem:[%s0] sm:$0xff]
    %v15 = vld [vmem:[%s0 + $0x8] sm:$0xff]
    %16 = vset.pattern.permute.xlu0 0
    %17 = vperm.xlu0 %16, %v14
    %v18 = vpop.permute.xlu0 %17
    %19 = vset.pattern.permute.xlu0 0
    %20 = vperm.xlu0 %19, %v15
    %v21 = vpop.permute.xlu0 %20
    %vm22 = vcmp.eq.s32.totalorder %v13, %v18
    %vm23 = vcmp.eq.s32.totalorder %v13, %v21
    %v24 = vsel %vm22, 1, 0
    %v25 = vsel %vm23, 1, 0
    %v26 = vcvt.s32.f32 %v24
    %v27 = vcvt.s32.f32 %v25
    %v28 = vld [vmem:[%s1] sm:$0xff]
    %v29 = vld [vmem:[%s1 + $0x8] sm:$0xff]
    %vm30 = vcmask 64512
    %v32 = vsel %vm30, %v26, 0
    %34 = vmatprep.subr.mxu0 0.0
    %v35 = vand.u32 %v28, 4294901760
    %36 = vmatpush1.msra.mxu0 %v35
    %37 = vmatprep.subr.mxu0 0.0
    %38 = vmatpush1.msra.mxu0 0.0
    %39 = vmatprep.subr.mxu0 0.0
    %40 = vmatpush1.msra.mxu0 0.0
    %41 = vmatprep.subr.mxu0 0.0
    %42 = vmatpush1.msra.mxu0 0.0
    %43 = vmatprep.subr.mxu0 0.0
    %44 = vmatpush1.msra.mxu0 0.0
    %45 = vmatprep.subr.mxu0 0.0
    %46 = vmatpush1.msra.mxu0 0.0
    %47 = vmatprep.subr.mxu0 0.0
    %48 = vmatpush1.msra.mxu0 0.0
    %49 = vmatprep.subr.mxu0 0.0
    %50 = vmatpush1.msra.mxu0 0.0
    %51 = vmatprep.subr.mxu0 0.0
    %52 = vmatpush1.msra.mxu0 0.0
    %53 = vmatprep.subr.mxu0 0.0
    %54 = vmatpush1.msra.mxu0 0.0
    %55 = vmatprep.subr.mxu0 0.0
    %56 = vmatpush1.msra.mxu0 0.0
    %57 = vmatprep.subr.mxu0 0.0
    %58 = vmatpush1.msra.mxu0 0.0
    %59 = vmatprep.subr.mxu0 0.0
    %60 = vmatpush1.msra.mxu0 0.0
    %61 = vmatprep.subr.mxu0 0.0
    %62 = vmatpush1.msra.mxu0 0.0
    %63 = vmatprep.subr.mxu0 0.0
    %64 = vmatpush1.msra.mxu0 0.0
    %65 = vmatprep.subr.mxu0 0.0
    %66 = vmatpush1.msra.mxu0 0.0
    %67 = vmatprep.subr.mxu0 0.0
    %68 = vmatpush1.msra.mxu0 0.0
    %69 = vmatprep.subr.mxu0 0.0
    %70 = vmatpush1.msra.mxu0 0.0
    %71 = vmatprep.subr.mxu0 0.0
    %72 = vmatpush1.msra.mxu0 0.0
    %73 = vmatprep.subr.mxu0 0.0
    %74 = vmatpush1.msra.mxu0 0.0
    %75 = vmatprep.subr.mxu0 0.0
    %76 = vmatpush1.msra.mxu0 0.0
    %77 = vmatprep.subr.mxu0 0.0
    %78 = vmatpush1.msra.mxu0 0.0
    %79 = vmatprep.subr.mxu0 0.0
    %80 = vmatpush1.msra.mxu0 0.0
    %81 = vmatprep.subr.mxu0 0.0
    %82 = vmatpush1.msra.mxu0 0.0
    %83 = vmatprep.subr.mxu0 0.0
    %84 = vmatpush1.msra.mxu0 0.0
    %85 = vmatprep.subr.mxu0 0.0
    %86 = vmatpush1.msra.mxu0 0.0
    %87 = vmatprep.subr.mxu0 0.0
    %88 = vmatpush1.msra.mxu0 0.0
    %89 = vmatprep.subr.mxu0 0.0
    %90 = vmatpush1.msra.mxu0 0.0
    %91 = vmatprep.subr.mxu0 0.0
    %92 = vmatpush1.msra.mxu0 0.0
    %93 = vmatprep.subr.mxu0 0.0
    %94 = vmatpush1.msra.mxu0 0.0
    %95 = vmatprep.subr.mxu0 0.0
    %96 = vmatpush1.msra.mxu0 0.0
    %97 = vmatprep.subr.mxu0 0.0
    %98 = vmatpush1.msra.mxu0 0.0
    %99 = vmatprep.mubr.f32.mxu0 0.0
    %v100 = vand.u32 %v32, 4294901760
    %v101 = vsub.f32 %v32, %v100
    %v102 = vand.u32 %v101, 4294901760
    %v103 = vsub.f32 %v101, %v102
    %v104 = vand.u32 %v103, 4294901760
    %105 = vmatmul.mubr.f32.gmra.mrb[0].mxu0 %v104
    %v106 = vpop.f32.mrb[0].mxu0
    %v107 = vadd.f32 0.0, %v106
    %v108 = vpop.f32.mrb[0].mxu0
    %109 = vdwg.mxu0
    %110 = vmatprep.subr.mxu0 0.0
    %v111 = vand.u32 %v28, 4294901760
    %v112 = vsub.f32 %v28, %v111
    %v113 = vand.u32 %v112, 4294901760
    %v114 = vsub.f32 %v112, %v113
    %v115 = vand.u32 %v114, 4294901760
    %116 = vmatpush1.msra.mxu0 %v115
    %117 = vmatprep.subr.mxu0 0.0
    %118 = vmatpush1.msra.mxu0 0.0
    %119 = vmatprep.subr.mxu0 0.0
    %120 = vmatpush1.msra.mxu0 0.0
    %121 = vmatprep.subr.mxu0 0.0
    %122 = vmatpush1.msra.mxu0 0.0
    %123 = vmatprep.subr.mxu0 0.0
    %124 = vmatpush1.msra.mxu0 0.0
    %125 = vmatprep.subr.mxu0 0.0
    %126 = vmatpush1.msra.mxu0 0.0
    %127 = vmatprep.subr.mxu0 0.0
    %128 = vmatpush1.msra.mxu0 0.0
    %129 = vmatprep.subr.mxu0 0.0
    %130 = vmatpush1.msra.mxu0 0.0
    %131 = vmatprep.subr.mxu0 0.0
    %132 = vmatpush1.msra.mxu0 0.0
    %133 = vmatprep.subr.mxu0 0.0
    %134 = vmatpush1.msra.mxu0 0.0
    %135 = vmatprep.subr.mxu0 0.0
    %136 = vmatpush1.msra.mxu0 0.0
    %137 = vmatprep.subr.mxu0 0.0
    %138 = vmatpush1.msra.mxu0 0.0
    %139 = vmatprep.subr.mxu0 0.0
    %140 = vmatpush1.msra.mxu0 0.0
    %141 = vmatprep.subr.mxu0 0.0
    %142 = vmatpush1.msra.mxu0 0.0
    %143 = vmatprep.subr.mxu0 0.0
    %144 = vmatpush1.msra.mxu0 0.0
    %145 = vmatprep.subr.mxu0 0.0
    %146 = vmatpush1.msra.mxu0 0.0
    %147 = vmatprep.subr.mxu0 0.0
    %148 = vmatpush1.msra.mxu0 0.0
    %149 = vmatprep.subr.mxu0 0.0
    %150 = vmatpush1.msra.mxu0 0.0
    %151 = vmatprep.subr.mxu0 0.0
    %152 = vmatpush1.msra.mxu0 0.0
    %153 = vmatprep.subr.mxu0 0.0
    %154 = vmatpush1.msra.mxu0 0.0
    %155 = vmatprep.subr.mxu0 0.0
    %156 = vmatpush1.msra.mxu0 0.0
    %157 = vmatprep.subr.mxu0 0.0
    %158 = vmatpush1.msra.mxu0 0.0
    %159 = vmatprep.subr.mxu0 0.0
    %160 = vmatpush1.msra.mxu0 0.0
    %161 = vmatprep.subr.mxu0 0.0
    %162 = vmatpush1.msra.mxu0 0.0
    %163 = vmatprep.subr.mxu0 0.0
    %164 = vmatpush1.msra.mxu0 0.0
    %165 = vmatprep.subr.mxu0 0.0
    %166 = vmatpush1.msra.mxu0 0.0
    %167 = vmatprep.subr.mxu0 0.0
    %168 = vmatpush1.msra.mxu0 0.0
    %169 = vmatprep.subr.mxu0 0.0
    %170 = vmatpush1.msra.mxu0 0.0
    %171 = vmatprep.subr.mxu0 0.0
    %172 = vmatpush1.msra.mxu0 0.0
    %173 = vmatprep.subr.mxu0 0.0
    %174 = vmatpush1.msra.mxu0 0.0
    %175 = vmatprep.subr.mxu0 0.0
    %176 = vmatpush1.msra.mxu0 0.0
    %177 = vmatprep.subr.mxu0 0.0
    %178 = vmatpush1.msra.mxu0 0.0
    %179 = vmatprep.mubr.f32.mxu0 0.0
    %v180 = vand.u32 %v32, 4294901760
    %181 = vmatmul.mubr.f32.gmra.mrb[0].mxu0 %v180
    %v182 = vpop.f32.mrb[0].mxu0
    %v183 = vadd.f32 %v107, %v182
    %v184 = vpop.f32.mrb[0].mxu0
    %185 = vdwg.mxu0
    %186 = vmatprep.subr.mxu0 0.0
    %v187 = vand.u32 %v28, 4294901760
    %v188 = vsub.f32 %v28, %v187
    %189 = vmatpush1.msra.mxu0 %v188
    %190 = vmatprep.subr.mxu0 0.0
    %191 = vmatpush1.msra.mxu0 0.0
    %192 = vmatprep.subr.mxu0 0.0
    %193 = vmatpush1.msra.mxu0 0.0
    %194 = vmatprep.subr.mxu0 0.0
    %195 = vmatpush1.msra.mxu0 0.0
    %196 = vmatprep.subr.mxu0 0.0
    %197 = vmatpush1.msra.mxu0 0.0
    %198 = vmatprep.subr.mxu0 0.0
    %199 = vmatpush1.msra.mxu0 0.0
    %200 = vmatprep.subr.mxu0 0.0
    %201 = vmatpush1.msra.mxu0 0.0
    %202 = vmatprep.subr.mxu0 0.0
    %203 = vmatpush1.msra.mxu0 0.0
    %204 = vmatprep.subr.mxu0 0.0
    %205 = vmatpush1.msra.mxu0 0.0
    %206 = vmatprep.subr.mxu0 0.0
    %207 = vmatpush1.msra.mxu0 0.0
    %208 = vmatprep.subr.mxu0 0.0
    %209 = vmatpush1.msra.mxu0 0.0
    %210 = vmatprep.subr.mxu0 0.0
    %211 = vmatpush1.msra.mxu0 0.0
    %212 = vmatprep.subr.mxu0 0.0
    %213 = vmatpush1.msra.mxu0 0.0
    %214 = vmatprep.subr.mxu0 0.0
    %215 = vmatpush1.msra.mxu0 0.0
    %216 = vmatprep.subr.mxu0 0.0
    %217 = vmatpush1.msra.mxu0 0.0
    %218 = vmatprep.subr.mxu0 0.0
    %219 = vmatpush1.msra.mxu0 0.0
    %220 = vmatprep.subr.mxu0 0.0
    %221 = vmatpush1.msra.mxu0 0.0
    %222 = vmatprep.subr.mxu0 0.0
    %223 = vmatpush1.msra.mxu0 0.0
    %224 = vmatprep.subr.mxu0 0.0
    %225 = vmatpush1.msra.mxu0 0.0
    %226 = vmatprep.subr.mxu0 0.0
    %227 = vmatpush1.msra.mxu0 0.0
    %228 = vmatprep.subr.mxu0 0.0
    %229 = vmatpush1.msra.mxu0 0.0
    %230 = vmatprep.subr.mxu0 0.0
    %231 = vmatpush1.msra.mxu0 0.0
    %232 = vmatprep.subr.mxu0 0.0
    %233 = vmatpush1.msra.mxu0 0.0
    %234 = vmatprep.subr.mxu0 0.0
    %235 = vmatpush1.msra.mxu0 0.0
    %236 = vmatprep.subr.mxu0 0.0
    %237 = vmatpush1.msra.mxu0 0.0
    %238 = vmatprep.subr.mxu0 0.0
    %239 = vmatpush1.msra.mxu0 0.0
    %240 = vmatprep.subr.mxu0 0.0
    %241 = vmatpush1.msra.mxu0 0.0
    %242 = vmatprep.subr.mxu0 0.0
    %243 = vmatpush1.msra.mxu0 0.0
    %244 = vmatprep.subr.mxu0 0.0
    %245 = vmatpush1.msra.mxu0 0.0
    %246 = vmatprep.subr.mxu0 0.0
    %247 = vmatpush1.msra.mxu0 0.0
    %248 = vmatprep.subr.mxu0 0.0
    %249 = vmatpush1.msra.mxu0 0.0
    %250 = vmatprep.subr.mxu0 0.0
    %251 = vmatpush1.msra.mxu0 0.0
    %252 = vmatprep.mubr.f32.mxu0 0.0
    %v253 = vand.u32 %v32, 4294901760
    %v254 = vsub.f32 %v32, %v253
    %255 = vmatmul.mubr.f32.gmra.mrb[0].mxu0 %v254
    %v256 = vpop.f32.mrb[0].mxu0
    %v257 = vadd.f32 %v183, %v256
    %v258 = vpop.f32.mrb[0].mxu0
    %259 = vdwg.mxu0
    %260 = vmatprep.subr.mxu0 0.0
    %v261 = vand.u32 %v28, 4294901760
    %262 = vmatpush1.msra.mxu0 %v261
    %263 = vmatprep.subr.mxu0 0.0
    %264 = vmatpush1.msra.mxu0 0.0
    %265 = vmatprep.subr.mxu0 0.0
    %266 = vmatpush1.msra.mxu0 0.0
    %267 = vmatprep.subr.mxu0 0.0
    %268 = vmatpush1.msra.mxu0 0.0
    %269 = vmatprep.subr.mxu0 0.0
    %270 = vmatpush1.msra.mxu0 0.0
    %271 = vmatprep.subr.mxu0 0.0
    %272 = vmatpush1.msra.mxu0 0.0
    %273 = vmatprep.subr.mxu0 0.0
    %274 = vmatpush1.msra.mxu0 0.0
    %275 = vmatprep.subr.mxu0 0.0
    %276 = vmatpush1.msra.mxu0 0.0
    %277 = vmatprep.subr.mxu0 0.0
    %278 = vmatpush1.msra.mxu0 0.0
    %279 = vmatprep.subr.mxu0 0.0
    %280 = vmatpush1.msra.mxu0 0.0
    %281 = vmatprep.subr.mxu0 0.0
    %282 = vmatpush1.msra.mxu0 0.0
    %283 = vmatprep.subr.mxu0 0.0
    %284 = vmatpush1.msra.mxu0 0.0
    %285 = vmatprep.subr.mxu0 0.0
    %286 = vmatpush1.msra.mxu0 0.0
    %287 = vmatprep.subr.mxu0 0.0
    %288 = vmatpush1.msra.mxu0 0.0
    %289 = vmatprep.subr.mxu0 0.0
    %290 = vmatpush1.msra.mxu0 0.0
    %291 = vmatprep.subr.mxu0 0.0
    %292 = vmatpush1.msra.mxu0 0.0
    %293 = vmatprep.subr.mxu0 0.0
    %294 = vmatpush1.msra.mxu0 0.0
    %295 = vmatprep.subr.mxu0 0.0
    %296 = vmatpush1.msra.mxu0 0.0
    %297 = vmatprep.subr.mxu0 0.0
    %298 = vmatpush1.msra.mxu0 0.0
    %299 = vmatprep.subr.mxu0 0.0
    %300 = vmatpush1.msra.mxu0 0.0
    %301 = vmatprep.subr.mxu0 0.0
    %302 = vmatpush1.msra.mxu0 0.0
    %303 = vmatprep.subr.mxu0 0.0
    %304 = vmatpush1.msra.mxu0 0.0
    %305 = vmatprep.subr.mxu0 0.0
    %306 = vmatpush1.msra.mxu0 0.0
    %307 = vmatprep.subr.mxu0 0.0
    %308 = vmatpush1.msra.mxu0 0.0
    %309 = vmatprep.subr.mxu0 0.0
    %310 = vmatpush1.msra.mxu0 0.0
    %311 = vmatprep.subr.mxu0 0.0
    %312 = vmatpush1.msra.mxu0 0.0
    %313 = vmatprep.subr.mxu0 0.0
    %314 = vmatpush1.msra.mxu0 0.0
    %315 = vmatprep.subr.mxu0 0.0
    %316 = vmatpush1.msra.mxu0 0.0
    %317 = vmatprep.subr.mxu0 0.0
    %318 = vmatpush1.msra.mxu0 0.0
    %319 = vmatprep.subr.mxu0 0.0
    %320 = vmatpush1.msra.mxu0 0.0
    %321 = vmatprep.subr.mxu0 0.0
    %322 = vmatpush1.msra.mxu0 0.0
    %323 = vmatprep.subr.mxu0 0.0
    %324 = vmatpush1.msra.mxu0 0.0
    %325 = vmatprep.mubr.f32.mxu0 0.0
    %v326 = vand.u32 %v32, 4294901760
    %v327 = vsub.f32 %v32, %v326
    %v328 = vand.u32 %v327, 4294901760
    %329 = vmatmul.mubr.f32.gmra.mrb[0].mxu0 %v328
    %v330 = vpop.f32.mrb[0].mxu0
    %v331 = vadd.f32 %v257, %v330
    %v332 = vpop.f32.mrb[0].mxu0
    %333 = vdwg.mxu0
    %334 = vmatprep.subr.mxu0 0.0
    %v335 = vand.u32 %v28, 4294901760
    %v336 = vsub.f32 %v28, %v335
    %v337 = vand.u32 %v336, 4294901760
    %338 = vmatpush1.msra.mxu0 %v337
    %339 = vmatprep.subr.mxu0 0.0
    %340 = vmatpush1.msra.mxu0 0.0
    %341 = vmatprep.subr.mxu0 0.0
    %342 = vmatpush1.msra.mxu0 0.0
    %343 = vmatprep.subr.mxu0 0.0
    %344 = vmatpush1.msra.mxu0 0.0
    %345 = vmatprep.subr.mxu0 0.0
    %346 = vmatpush1.msra.mxu0 0.0
    %347 = vmatprep.subr.mxu0 0.0
    %348 = vmatpush1.msra.mxu0 0.0
    %349 = vmatprep.subr.mxu0 0.0
    %350 = vmatpush1.msra.mxu0 0.0
    %351 = vmatprep.subr.mxu0 0.0
    %352 = vmatpush1.msra.mxu0 0.0
    %353 = vmatprep.subr.mxu0 0.0
    %354 = vmatpush1.msra.mxu0 0.0
    %355 = vmatprep.subr.mxu0 0.0
    %356 = vmatpush1.msra.mxu0 0.0
    %357 = vmatprep.subr.mxu0 0.0
    %358 = vmatpush1.msra.mxu0 0.0
    %359 = vmatprep.subr.mxu0 0.0
    %360 = vmatpush1.msra.mxu0 0.0
    %361 = vmatprep.subr.mxu0 0.0
    %362 = vmatpush1.msra.mxu0 0.0
    %363 = vmatprep.subr.mxu0 0.0
    %364 = vmatpush1.msra.mxu0 0.0
    %365 = vmatprep.subr.mxu0 0.0
    %366 = vmatpush1.msra.mxu0 0.0
    %367 = vmatprep.subr.mxu0 0.0
    %368 = vmatpush1.msra.mxu0 0.0
    %369 = vmatprep.subr.mxu0 0.0
    %370 = vmatpush1.msra.mxu0 0.0
    %371 = vmatprep.subr.mxu0 0.0
    %372 = vmatpush1.msra.mxu0 0.0
    %373 = vmatprep.subr.mxu0 0.0
    %374 = vmatpush1.msra.mxu0 0.0
    %375 = vmatprep.subr.mxu0 0.0
    %376 = vmatpush1.msra.mxu0 0.0
    %377 = vmatprep.subr.mxu0 0.0
    %378 = vmatpush1.msra.mxu0 0.0
    %379 = vmatprep.subr.mxu0 0.0
    %380 = vmatpush1.msra.mxu0 0.0
    %381 = vmatprep.subr.mxu0 0.0
    %382 = vmatpush1.msra.mxu0 0.0
    %383 = vmatprep.subr.mxu0 0.0
    %384 = vmatpush1.msra.mxu0 0.0
    %385 = vmatprep.subr.mxu0 0.0
    %386 = vmatpush1.msra.mxu0 0.0
    %387 = vmatprep.subr.mxu0 0.0
    %388 = vmatpush1.msra.mxu0 0.0
    %389 = vmatprep.subr.mxu0 0.0
    %390 = vmatpush1.msra.mxu0 0.0
    %391 = vmatprep.subr.mxu0 0.0
    %392 = vmatpush1.msra.mxu0 0.0
    %393 = vmatprep.subr.mxu0 0.0
    %394 = vmatpush1.msra.mxu0 0.0
    %395 = vmatprep.subr.mxu0 0.0
    %396 = vmatpush1.msra.mxu0 0.0
    %397 = vmatprep.subr.mxu0 0.0
    %398 = vmatpush1.msra.mxu0 0.0
    %399 = vmatprep.subr.mxu0 0.0
    %400 = vmatpush1.msra.mxu0 0.0
    %401 = vmatprep.mubr.f32.mxu0 0.0
    %v402 = vand.u32 %v32, 4294901760
    %403 = vmatmul.mubr.f32.gmra.mrb[0].mxu0 %v402
    %v404 = vpop.f32.mrb[0].mxu0
    %v405 = vadd.f32 %v331, %v404
    %v406 = vpop.f32.mrb[0].mxu0
    %407 = vdwg.mxu0
    %408 = vmatprep.subr.mxu0 0.0
    %v409 = vand.u32 %v28, 4294901760
    %410 = vmatpush1.msra.mxu0 %v409
    %411 = vmatprep.subr.mxu0 0.0
    %412 = vmatpush1.msra.mxu0 0.0
    %413 = vmatprep.subr.mxu0 0.0
    %414 = vmatpush1.msra.mxu0 0.0
    %415 = vmatprep.subr.mxu0 0.0
    %416 = vmatpush1.msra.mxu0 0.0
    %417 = vmatprep.subr.mxu0 0.0
    %418 = vmatpush1.msra.mxu0 0.0
    %419 = vmatprep.subr.mxu0 0.0
    %420 = vmatpush1.msra.mxu0 0.0
    %421 = vmatprep.subr.mxu0 0.0
    %422 = vmatpush1.msra.mxu0 0.0
    %423 = vmatprep.subr.mxu0 0.0
    %424 = vmatpush1.msra.mxu0 0.0
    %425 = vmatprep.subr.mxu0 0.0
    %426 = vmatpush1.msra.mxu0 0.0
    %427 = vmatprep.subr.mxu0 0.0
    %428 = vmatpush1.msra.mxu0 0.0
    %429 = vmatprep.subr.mxu0 0.0
    %430 = vmatpush1.msra.mxu0 0.0
    %431 = vmatprep.subr.mxu0 0.0
    %432 = vmatpush1.msra.mxu0 0.0
    %433 = vmatprep.subr.mxu0 0.0
    %434 = vmatpush1.msra.mxu0 0.0
    %435 = vmatprep.subr.mxu0 0.0
    %436 = vmatpush1.msra.mxu0 0.0
    %437 = vmatprep.subr.mxu0 0.0
    %438 = vmatpush1.msra.mxu0 0.0
    %439 = vmatprep.subr.mxu0 0.0
    %440 = vmatpush1.msra.mxu0 0.0
    %441 = vmatprep.subr.mxu0 0.0
    %442 = vmatpush1.msra.mxu0 0.0
    %443 = vmatprep.subr.mxu0 0.0
    %444 = vmatpush1.msra.mxu0 0.0
    %445 = vmatprep.subr.mxu0 0.0
    %446 = vmatpush1.msra.mxu0 0.0
    %447 = vmatprep.subr.mxu0 0.0
    %448 = vmatpush1.msra.mxu0 0.0
    %449 = vmatprep.subr.mxu0 0.0
    %450 = vmatpush1.msra.mxu0 0.0
    %451 = vmatprep.subr.mxu0 0.0
    %452 = vmatpush1.msra.mxu0 0.0
    %453 = vmatprep.subr.mxu0 0.0
    %454 = vmatpush1.msra.mxu0 0.0
    %455 = vmatprep.subr.mxu0 0.0
    %456 = vmatpush1.msra.mxu0 0.0
    %457 = vmatprep.subr.mxu0 0.0
    %458 = vmatpush1.msra.mxu0 0.0
    %459 = vmatprep.subr.mxu0 0.0
    %460 = vmatpush1.msra.mxu0 0.0
    %461 = vmatprep.subr.mxu0 0.0
    %462 = vmatpush1.msra.mxu0 0.0
    %463 = vmatprep.subr.mxu0 0.0
    %464 = vmatpush1.msra.mxu0 0.0
    %465 = vmatprep.subr.mxu0 0.0
    %466 = vmatpush1.msra.mxu0 0.0
    %467 = vmatprep.subr.mxu0 0.0
    %468 = vmatpush1.msra.mxu0 0.0
    %469 = vmatprep.subr.mxu0 0.0
    %470 = vmatpush1.msra.mxu0 0.0
    %471 = vmatprep.subr.mxu0 0.0
    %472 = vmatpush1.msra.mxu0 0.0
    %473 = vmatprep.mubr.f32.mxu0 0.0
    %v474 = vand.u32 %v32, 4294901760
    %475 = vmatmul.mubr.f32.gmra.mrb[0].mxu0 %v474
    %v476 = vpop.f32.mrb[0].mxu0
    %v477 = vadd.f32 %v405, %v476
    %v478 = vpop.f32.mrb[0].mxu0
    %479 = vdwg.mxu0
    %v481 = vsel %vm30, %v27, 0
    %483 = vmatprep.subr.mxu0 0.0
    %v484 = vand.u32 %v29, 4294901760
    %485 = vmatpush1.msra.mxu0 %v484
    %486 = vmatprep.subr.mxu0 0.0
    %487 = vmatpush1.msra.mxu0 0.0
    %488 = vmatprep.subr.mxu0 0.0
    %489 = vmatpush1.msra.mxu0 0.0
    %490 = vmatprep.subr.mxu0 0.0
    %491 = vmatpush1.msra.mxu0 0.0
    %492 = vmatprep.subr.mxu0 0.0
    %493 = vmatpush1.msra.mxu0 0.0
    %494 = vmatprep.subr.mxu0 0.0
    %495 = vmatpush1.msra.mxu0 0.0
    %496 = vmatprep.subr.mxu0 0.0
    %497 = vmatpush1.msra.mxu0 0.0
    %498 = vmatprep.subr.mxu0 0.0
    %499 = vmatpush1.msra.mxu0 0.0
    %500 = vmatprep.subr.mxu0 0.0
    %501 = vmatpush1.msra.mxu0 0.0
    %502 = vmatprep.subr.mxu0 0.0
    %503 = vmatpush1.msra.mxu0 0.0
    %504 = vmatprep.subr.mxu0 0.0
    %505 = vmatpush1.msra.mxu0 0.0
    %506 = vmatprep.subr.mxu0 0.0
    %507 = vmatpush1.msra.mxu0 0.0
    %508 = vmatprep.subr.mxu0 0.0
    %509 = vmatpush1.msra.mxu0 0.0
    %510 = vmatprep.subr.mxu0 0.0
    %511 = vmatpush1.msra.mxu0 0.0
    %512 = vmatprep.subr.mxu0 0.0
    %513 = vmatpush1.msra.mxu0 0.0
    %514 = vmatprep.subr.mxu0 0.0
    %515 = vmatpush1.msra.mxu0 0.0
    %516 = vmatprep.subr.mxu0 0.0
    %517 = vmatpush1.msra.mxu0 0.0
    %518 = vmatprep.subr.mxu0 0.0
    %519 = vmatpush1.msra.mxu0 0.0
    %520 = vmatprep.subr.mxu0 0.0
    %521 = vmatpush1.msra.mxu0 0.0
    %522 = vmatprep.subr.mxu0 0.0
    %523 = vmatpush1.msra.mxu0 0.0
    %524 = vmatprep.subr.mxu0 0.0
    %525 = vmatpush1.msra.mxu0 0.0
    %526 = vmatprep.subr.mxu0 0.0
    %527 = vmatpush1.msra.mxu0 0.0
    %528 = vmatprep.subr.mxu0 0.0
    %529 = vmatpush1.msra.mxu0 0.0
    %530 = vmatprep.subr.mxu0 0.0
    %531 = vmatpush1.msra.mxu0 0.0
    %532 = vmatprep.subr.mxu0 0.0
    %533 = vmatpush1.msra.mxu0 0.0
    %534 = vmatprep.subr.mxu0 0.0
    %535 = vmatpush1.msra.mxu0 0.0
    %536 = vmatprep.subr.mxu0 0.0
    %537 = vmatpush1.msra.mxu0 0.0
    %538 = vmatprep.subr.mxu0 0.0
    %539 = vmatpush1.msra.mxu0 0.0
    %540 = vmatprep.subr.mxu0 0.0
    %541 = vmatpush1.msra.mxu0 0.0
    %542 = vmatprep.subr.mxu0 0.0
    %543 = vmatpush1.msra.mxu0 0.0
    %544 = vmatprep.subr.mxu0 0.0
    %545 = vmatpush1.msra.mxu0 0.0
    %546 = vmatprep.subr.mxu0 0.0
    %547 = vmatpush1.msra.mxu0 0.0
    %548 = vmatprep.mubr.f32.mxu0 0.0
    %v549 = vand.u32 %v481, 4294901760
    %v550 = vsub.f32 %v481, %v549
    %v551 = vand.u32 %v550, 4294901760
    %v552 = vsub.f32 %v550, %v551
    %v553 = vand.u32 %v552, 4294901760
    %554 = vmatmul.mubr.f32.gmra.mrb[0].mxu0 %v553
    %v555 = vpop.f32.mrb[0].mxu0
    %v556 = vadd.f32 0.0, %v555
    %v557 = vpop.f32.mrb[0].mxu0
    %558 = vdwg.mxu0
    %559 = vmatprep.subr.mxu0 0.0
    %v560 = vand.u32 %v29, 4294901760
    %v561 = vsub.f32 %v29, %v560
    %v562 = vand.u32 %v561, 4294901760
    %v563 = vsub.f32 %v561, %v562
    %v564 = vand.u32 %v563, 4294901760
    %565 = vmatpush1.msra.mxu0 %v564
    %566 = vmatprep.subr.mxu0 0.0
    %567 = vmatpush1.msra.mxu0 0.0
    %568 = vmatprep.subr.mxu0 0.0
    %569 = vmatpush1.msra.mxu0 0.0
    %570 = vmatprep.subr.mxu0 0.0
    %571 = vmatpush1.msra.mxu0 0.0
    %572 = vmatprep.subr.mxu0 0.0
    %573 = vmatpush1.msra.mxu0 0.0
    %574 = vmatprep.subr.mxu0 0.0
    %575 = vmatpush1.msra.mxu0 0.0
    %576 = vmatprep.subr.mxu0 0.0
    %577 = vmatpush1.msra.mxu0 0.0
    %578 = vmatprep.subr.mxu0 0.0
    %579 = vmatpush1.msra.mxu0 0.0
    %580 = vmatprep.subr.mxu0 0.0
    %581 = vmatpush1.msra.mxu0 0.0
    %582 = vmatprep.subr.mxu0 0.0
    %583 = vmatpush1.msra.mxu0 0.0
    %584 = vmatprep.subr.mxu0 0.0
    %585 = vmatpush1.msra.mxu0 0.0
    %586 = vmatprep.subr.mxu0 0.0
    %587 = vmatpush1.msra.mxu0 0.0
    %588 = vmatprep.subr.mxu0 0.0
    %589 = vmatpush1.msra.mxu0 0.0
    %590 = vmatprep.subr.mxu0 0.0
    %591 = vmatpush1.msra.mxu0 0.0
    %592 = vmatprep.subr.mxu0 0.0
    %593 = vmatpush1.msra.mxu0 0.0
    %594 = vmatprep.subr.mxu0 0.0
    %595 = vmatpush1.msra.mxu0 0.0
    %596 = vmatprep.subr.mxu0 0.0
    %597 = vmatpush1.msra.mxu0 0.0
    %598 = vmatprep.subr.mxu0 0.0
    %599 = vmatpush1.msra.mxu0 0.0
    %600 = vmatprep.subr.mxu0 0.0
    %601 = vmatpush1.msra.mxu0 0.0
    %602 = vmatprep.subr.mxu0 0.0
    %603 = vmatpush1.msra.mxu0 0.0
    %604 = vmatprep.subr.mxu0 0.0
    %605 = vmatpush1.msra.mxu0 0.0
    %606 = vmatprep.subr.mxu0 0.0
    %607 = vmatpush1.msra.mxu0 0.0
    %608 = vmatprep.subr.mxu0 0.0
    %609 = vmatpush1.msra.mxu0 0.0
    %610 = vmatprep.subr.mxu0 0.0
    %611 = vmatpush1.msra.mxu0 0.0
    %612 = vmatprep.subr.mxu0 0.0
    %613 = vmatpush1.msra.mxu0 0.0
    %614 = vmatprep.subr.mxu0 0.0
    %615 = vmatpush1.msra.mxu0 0.0
    %616 = vmatprep.subr.mxu0 0.0
    %617 = vmatpush1.msra.mxu0 0.0
    %618 = vmatprep.subr.mxu0 0.0
    %619 = vmatpush1.msra.mxu0 0.0
    %620 = vmatprep.subr.mxu0 0.0
    %621 = vmatpush1.msra.mxu0 0.0
    %622 = vmatprep.subr.mxu0 0.0
    %623 = vmatpush1.msra.mxu0 0.0
    %624 = vmatprep.subr.mxu0 0.0
    %625 = vmatpush1.msra.mxu0 0.0
    %626 = vmatprep.subr.mxu0 0.0
    %627 = vmatpush1.msra.mxu0 0.0
    %628 = vmatprep.mubr.f32.mxu0 0.0
    %v629 = vand.u32 %v481, 4294901760
    %630 = vmatmul.mubr.f32.gmra.mrb[0].mxu0 %v629
    %v631 = vpop.f32.mrb[0].mxu0
    %v632 = vadd.f32 %v556, %v631
    %v633 = vpop.f32.mrb[0].mxu0
    %634 = vdwg.mxu0
    %635 = vmatprep.subr.mxu0 0.0
    %v636 = vand.u32 %v29, 4294901760
    %v637 = vsub.f32 %v29, %v636
    %638 = vmatpush1.msra.mxu0 %v637
    %639 = vmatprep.subr.mxu0 0.0
    %640 = vmatpush1.msra.mxu0 0.0
    %641 = vmatprep.subr.mxu0 0.0
    %642 = vmatpush1.msra.mxu0 0.0
    %643 = vmatprep.subr.mxu0 0.0
    %644 = vmatpush1.msra.mxu0 0.0
    %645 = vmatprep.subr.mxu0 0.0
    %646 = vmatpush1.msra.mxu0 0.0
    %647 = vmatprep.subr.mxu0 0.0
    %648 = vmatpush1.msra.mxu0 0.0
    %649 = vmatprep.subr.mxu0 0.0
    %650 = vmatpush1.msra.mxu0 0.0
    %651 = vmatprep.subr.mxu0 0.0
    %652 = vmatpush1.msra.mxu0 0.0
    %653 = vmatprep.subr.mxu0 0.0
    %654 = vmatpush1.msra.mxu0 0.0
    %655 = vmatprep.subr.mxu0 0.0
    %656 = vmatpush1.msra.mxu0 0.0
    %657 = vmatprep.subr.mxu0 0.0
    %658 = vmatpush1.msra.mxu0 0.0
    %659 = vmatprep.subr.mxu0 0.0
    %660 = vmatpush1.msra.mxu0 0.0
    %661 = vmatprep.subr.mxu0 0.0
    %662 = vmatpush1.msra.mxu0 0.0
    %663 = vmatprep.subr.mxu0 0.0
    %664 = vmatpush1.msra.mxu0 0.0
    %665 = vmatprep.subr.mxu0 0.0
    %666 = vmatpush1.msra.mxu0 0.0
    %667 = vmatprep.subr.mxu0 0.0
    %668 = vmatpush1.msra.mxu0 0.0
    %669 = vmatprep.subr.mxu0 0.0
    %670 = vmatpush1.msra.mxu0 0.0
    %671 = vmatprep.subr.mxu0 0.0
    %672 = vmatpush1.msra.mxu0 0.0
    %673 = vmatprep.subr.mxu0 0.0
    %674 = vmatpush1.msra.mxu0 0.0
    %675 = vmatprep.subr.mxu0 0.0
    %676 = vmatpush1.msra.mxu0 0.0
    %677 = vmatprep.subr.mxu0 0.0
    %678 = vmatpush1.msra.mxu0 0.0
    %679 = vmatprep.subr.mxu0 0.0
    %680 = vmatpush1.msra.mxu0 0.0
    %681 = vmatprep.subr.mxu0 0.0
    %682 = vmatpush1.msra.mxu0 0.0
    %683 = vmatprep.subr.mxu0 0.0
    %684 = vmatpush1.msra.mxu0 0.0
    %685 = vmatprep.subr.mxu0 0.0
    %686 = vmatpush1.msra.mxu0 0.0
    %687 = vmatprep.subr.mxu0 0.0
    %688 = vmatpush1.msra.mxu0 0.0
    %689 = vmatprep.subr.mxu0 0.0
    %690 = vmatpush1.msra.mxu0 0.0
    %691 = vmatprep.subr.mxu0 0.0
    %692 = vmatpush1.msra.mxu0 0.0
    %693 = vmatprep.subr.mxu0 0.0
    %694 = vmatpush1.msra.mxu0 0.0
    %695 = vmatprep.subr.mxu0 0.0
    %696 = vmatpush1.msra.mxu0 0.0
    %697 = vmatprep.subr.mxu0 0.0
    %698 = vmatpush1.msra.mxu0 0.0
    %699 = vmatprep.subr.mxu0 0.0
    %700 = vmatpush1.msra.mxu0 0.0
    %701 = vmatprep.mubr.f32.mxu0 0.0
    %v702 = vand.u32 %v481, 4294901760
    %v703 = vsub.f32 %v481, %v702
    %704 = vmatmul.mubr.f32.gmra.mrb[0].mxu0 %v703
    %v705 = vpop.f32.mrb[0].mxu0
    %v706 = vadd.f32 %v632, %v705
    %v707 = vpop.f32.mrb[0].mxu0
    %708 = vdwg.mxu0
    %709 = vmatprep.subr.mxu0 0.0
    %v710 = vand.u32 %v29, 4294901760
    %711 = vmatpush1.msra.mxu0 %v710
    %712 = vmatprep.subr.mxu0 0.0
    %713 = vmatpush1.msra.mxu0 0.0
    %714 = vmatprep.subr.mxu0 0.0
    %715 = vmatpush1.msra.mxu0 0.0
    %716 = vmatprep.subr.mxu0 0.0
    %717 = vmatpush1.msra.mxu0 0.0
    %718 = vmatprep.subr.mxu0 0.0
    %719 = vmatpush1.msra.mxu0 0.0
    %720 = vmatprep.subr.mxu0 0.0
    %721 = vmatpush1.msra.mxu0 0.0
    %722 = vmatprep.subr.mxu0 0.0
    %723 = vmatpush1.msra.mxu0 0.0
    %724 = vmatprep.subr.mxu0 0.0
    %725 = vmatpush1.msra.mxu0 0.0
    %726 = vmatprep.subr.mxu0 0.0
    %727 = vmatpush1.msra.mxu0 0.0
    %728 = vmatprep.subr.mxu0 0.0
    %729 = vmatpush1.msra.mxu0 0.0
    %730 = vmatprep.subr.mxu0 0.0
    %731 = vmatpush1.msra.mxu0 0.0
    %732 = vmatprep.subr.mxu0 0.0
    %733 = vmatpush1.msra.mxu0 0.0
    %734 = vmatprep.subr.mxu0 0.0
    %735 = vmatpush1.msra.mxu0 0.0
    %736 = vmatprep.subr.mxu0 0.0
    %737 = vmatpush1.msra.mxu0 0.0
    %738 = vmatprep.subr.mxu0 0.0
    %739 = vmatpush1.msra.mxu0 0.0
    %740 = vmatprep.subr.mxu0 0.0
    %741 = vmatpush1.msra.mxu0 0.0
    %742 = vmatprep.subr.mxu0 0.0
    %743 = vmatpush1.msra.mxu0 0.0
    %744 = vmatprep.subr.mxu0 0.0
    %745 = vmatpush1.msra.mxu0 0.0
    %746 = vmatprep.subr.mxu0 0.0
    %747 = vmatpush1.msra.mxu0 0.0
    %748 = vmatprep.subr.mxu0 0.0
    %749 = vmatpush1.msra.mxu0 0.0
    %750 = vmatprep.subr.mxu0 0.0
    %751 = vmatpush1.msra.mxu0 0.0
    %752 = vmatprep.subr.mxu0 0.0
    %753 = vmatpush1.msra.mxu0 0.0
    %754 = vmatprep.subr.mxu0 0.0
    %755 = vmatpush1.msra.mxu0 0.0
    %756 = vmatprep.subr.mxu0 0.0
    %757 = vmatpush1.msra.mxu0 0.0
    %758 = vmatprep.subr.mxu0 0.0
    %759 = vmatpush1.msra.mxu0 0.0
    %760 = vmatprep.subr.mxu0 0.0
    %761 = vmatpush1.msra.mxu0 0.0
    %762 = vmatprep.subr.mxu0 0.0
    %763 = vmatpush1.msra.mxu0 0.0
    %764 = vmatprep.subr.mxu0 0.0
    %765 = vmatpush1.msra.mxu0 0.0
    %766 = vmatprep.subr.mxu0 0.0
    %767 = vmatpush1.msra.mxu0 0.0
    %768 = vmatprep.subr.mxu0 0.0
    %769 = vmatpush1.msra.mxu0 0.0
    %770 = vmatprep.subr.mxu0 0.0
    %771 = vmatpush1.msra.mxu0 0.0
    %772 = vmatprep.subr.mxu0 0.0
    %773 = vmatpush1.msra.mxu0 0.0
    %774 = vmatprep.mubr.f32.mxu0 0.0
    %v775 = vand.u32 %v481, 4294901760
    %v776 = vsub.f32 %v481, %v775
    %v777 = vand.u32 %v776, 4294901760
    %778 = vmatmul.mubr.f32.gmra.mrb[0].mxu0 %v777
    %v779 = vpop.f32.mrb[0].mxu0
    %v780 = vadd.f32 %v706, %v779
    %v781 = vpop.f32.mrb[0].mxu0
    %782 = vdwg.mxu0
    %783 = vmatprep.subr.mxu0 0.0
    %v784 = vand.u32 %v29, 4294901760
    %v785 = vsub.f32 %v29, %v784
    %v786 = vand.u32 %v785, 4294901760
    %787 = vmatpush1.msra.mxu0 %v786
    %788 = vmatprep.subr.mxu0 0.0
    %789 = vmatpush1.msra.mxu0 0.0
    %790 = vmatprep.subr.mxu0 0.0
    %791 = vmatpush1.msra.mxu0 0.0
    %792 = vmatprep.subr.mxu0 0.0
    %793 = vmatpush1.msra.mxu0 0.0
    %794 = vmatprep.subr.mxu0 0.0
    %795 = vmatpush1.msra.mxu0 0.0
    %796 = vmatprep.subr.mxu0 0.0
    %797 = vmatpush1.msra.mxu0 0.0
    %798 = vmatprep.subr.mxu0 0.0
    %799 = vmatpush1.msra.mxu0 0.0
    %800 = vmatprep.subr.mxu0 0.0
    %801 = vmatpush1.msra.mxu0 0.0
    %802 = vmatprep.subr.mxu0 0.0
    %803 = vmatpush1.msra.mxu0 0.0
    %804 = vmatprep.subr.mxu0 0.0
    %805 = vmatpush1.msra.mxu0 0.0
    %806 = vmatprep.subr.mxu0 0.0
    %807 = vmatpush1.msra.mxu0 0.0
    %808 = vmatprep.subr.mxu0 0.0
    %809 = vmatpush1.msra.mxu0 0.0
    %810 = vmatprep.subr.mxu0 0.0
    %811 = vmatpush1.msra.mxu0 0.0
    %812 = vmatprep.subr.mxu0 0.0
    %813 = vmatpush1.msra.mxu0 0.0
    %814 = vmatprep.subr.mxu0 0.0
    %815 = vmatpush1.msra.mxu0 0.0
    %816 = vmatprep.subr.mxu0 0.0
    %817 = vmatpush1.msra.mxu0 0.0
    %818 = vmatprep.subr.mxu0 0.0
    %819 = vmatpush1.msra.mxu0 0.0
    %820 = vmatprep.subr.mxu0 0.0
    %821 = vmatpush1.msra.mxu0 0.0
    %822 = vmatprep.subr.mxu0 0.0
    %823 = vmatpush1.msra.mxu0 0.0
    %824 = vmatprep.subr.mxu0 0.0
    %825 = vmatpush1.msra.mxu0 0.0
    %826 = vmatprep.subr.mxu0 0.0
    %827 = vmatpush1.msra.mxu0 0.0
    %828 = vmatprep.subr.mxu0 0.0
    %829 = vmatpush1.msra.mxu0 0.0
    %830 = vmatprep.subr.mxu0 0.0
    %831 = vmatpush1.msra.mxu0 0.0
    %832 = vmatprep.subr.mxu0 0.0
    %833 = vmatpush1.msra.mxu0 0.0
    %834 = vmatprep.subr.mxu0 0.0
    %835 = vmatpush1.msra.mxu0 0.0
    %836 = vmatprep.subr.mxu0 0.0
    %837 = vmatpush1.msra.mxu0 0.0
    %838 = vmatprep.subr.mxu0 0.0
    %839 = vmatpush1.msra.mxu0 0.0
    %840 = vmatprep.subr.mxu0 0.0
    %841 = vmatpush1.msra.mxu0 0.0
    %842 = vmatprep.subr.mxu0 0.0
    %843 = vmatpush1.msra.mxu0 0.0
    %844 = vmatprep.subr.mxu0 0.0
    %845 = vmatpush1.msra.mxu0 0.0
    %846 = vmatprep.subr.mxu0 0.0
    %847 = vmatpush1.msra.mxu0 0.0
    %848 = vmatprep.subr.mxu0 0.0
    %849 = vmatpush1.msra.mxu0 0.0
    %850 = vmatprep.mubr.f32.mxu0 0.0
    %v851 = vand.u32 %v481, 4294901760
    %852 = vmatmul.mubr.f32.gmra.mrb[0].mxu0 %v851
    %v853 = vpop.f32.mrb[0].mxu0
    %v854 = vadd.f32 %v780, %v853
    %v855 = vpop.f32.mrb[0].mxu0
    %856 = vdwg.mxu0
    %857 = vmatprep.subr.mxu0 0.0
    %v858 = vand.u32 %v29, 4294901760
    %859 = vmatpush1.msra.mxu0 %v858
    %860 = vmatprep.subr.mxu0 0.0
    %861 = vmatpush1.msra.mxu0 0.0
    %862 = vmatprep.subr.mxu0 0.0
    %863 = vmatpush1.msra.mxu0 0.0
    %864 = vmatprep.subr.mxu0 0.0
    %865 = vmatpush1.msra.mxu0 0.0
    %866 = vmatprep.subr.mxu0 0.0
    %867 = vmatpush1.msra.mxu0 0.0
    %868 = vmatprep.subr.mxu0 0.0
    %869 = vmatpush1.msra.mxu0 0.0
    %870 = vmatprep.subr.mxu0 0.0
    %871 = vmatpush1.msra.mxu0 0.0
    %872 = vmatprep.subr.mxu0 0.0
    %873 = vmatpush1.msra.mxu0 0.0
    %874 = vmatprep.subr.mxu0 0.0
    %875 = vmatpush1.msra.mxu0 0.0
    %876 = vmatprep.subr.mxu0 0.0
    %877 = vmatpush1.msra.mxu0 0.0
    %878 = vmatprep.subr.mxu0 0.0
    %879 = vmatpush1.msra.mxu0 0.0
    %880 = vmatprep.subr.mxu0 0.0
    %881 = vmatpush1.msra.mxu0 0.0
    %882 = vmatprep.subr.mxu0 0.0
    %883 = vmatpush1.msra.mxu0 0.0
    %884 = vmatprep.subr.mxu0 0.0
    %885 = vmatpush1.msra.mxu0 0.0
    %886 = vmatprep.subr.mxu0 0.0
    %887 = vmatpush1.msra.mxu0 0.0
    %888 = vmatprep.subr.mxu0 0.0
    %889 = vmatpush1.msra.mxu0 0.0
    %890 = vmatprep.subr.mxu0 0.0
    %891 = vmatpush1.msra.mxu0 0.0
    %892 = vmatprep.subr.mxu0 0.0
    %893 = vmatpush1.msra.mxu0 0.0
    %894 = vmatprep.subr.mxu0 0.0
    %895 = vmatpush1.msra.mxu0 0.0
    %896 = vmatprep.subr.mxu0 0.0
    %897 = vmatpush1.msra.mxu0 0.0
    %898 = vmatprep.subr.mxu0 0.0
    %899 = vmatpush1.msra.mxu0 0.0
    %900 = vmatprep.subr.mxu0 0.0
    %901 = vmatpush1.msra.mxu0 0.0
    %902 = vmatprep.subr.mxu0 0.0
    %903 = vmatpush1.msra.mxu0 0.0
    %904 = vmatprep.subr.mxu0 0.0
    %905 = vmatpush1.msra.mxu0 0.0
    %906 = vmatprep.subr.mxu0 0.0
    %907 = vmatpush1.msra.mxu0 0.0
    %908 = vmatprep.subr.mxu0 0.0
    %909 = vmatpush1.msra.mxu0 0.0
    %910 = vmatprep.subr.mxu0 0.0
    %911 = vmatpush1.msra.mxu0 0.0
    %912 = vmatprep.subr.mxu0 0.0
    %913 = vmatpush1.msra.mxu0 0.0
    %914 = vmatprep.subr.mxu0 0.0
    %915 = vmatpush1.msra.mxu0 0.0
    %916 = vmatprep.subr.mxu0 0.0
    %917 = vmatpush1.msra.mxu0 0.0
    %918 = vmatprep.subr.mxu0 0.0
    %919 = vmatpush1.msra.mxu0 0.0
    %920 = vmatprep.subr.mxu0 0.0
    %921 = vmatpush1.msra.mxu0 0.0
    %922 = vmatprep.mubr.f32.mxu0 0.0
    %v923 = vand.u32 %v481, 4294901760
    %924 = vmatmul.mubr.f32.gmra.mrb[0].mxu0 %v923
    %v925 = vpop.f32.mrb[0].mxu0
    %v926 = vadd.f32 %v854, %v925
    %v927 = vpop.f32.mrb[0].mxu0
    %928 = vdwg.mxu0
    %929 = vst [vmem:[#allocation2] sm:$0xff] %v477
    %930 = vst [vmem:[#allocation2 + $0x8] sm:$0xff] %v926
    // Predicated region
    $region10: #{tpu_custom_call.1} parent=1 // pred_check
      _
    $region11: #{tpu_custom_call.1} parent=1 // pred_check_branch
      %932 = sbr.rel (0) target = $region13
    $region12: #{tpu_custom_call.1} parent=1 // pred_region
      %s934 = ssub.s32 256, 256
      %935 = vsyncadd [#allocation3], %s934
      %s936 = sshll.u32 [#allocation2], 4
      %s937 = int_to_ptr.vmem [resolvable:$true] %s936
      %942 = dma.vmem_to_hbm [thread:$0]  %s937, 256, %s2, [#allocation3], 128, 128, 8
    $region13: #{tpu_custom_call.1} parent=1 // pred_fallthru
      _
    // Predicated region
    $region14: #{tpu_custom_call.1} parent=1 // pred_check
      _
    $region15: #{tpu_custom_call.1} parent=1 // pred_check_branch
      %944 = sbr.rel (0) target = $region17
    $region16: #{tpu_custom_call.1} parent=1 // pred_region
      %945 = dma.done [#allocation3], 256
    $region17: #{tpu_custom_call.1} parent=1 // pred_fallthru
      _
    %946 = vsyncpa [#allocation3], 1

</llo_original>
